<compile_context>
chip_gen: v7x
topology: tpu7x:2x2x1
jax: 0.10.0
libtpu: 0.0.40
codegen_flags: <defaults>
</compile_context>

<pallas_src>
import functools

import jax
import jax.numpy as jnp
from jax import lax
from jax.experimental import pallas as pl
from jax.experimental.pallas import tpu as pltpu


def _dsconv_kernel(x_ref, wd_ref, bd_ref, wp_ref, bp_ref, o_ref, *, H, W, Cin):
    """Lane-dense depthwise-separable conv with batch folded onto sublanes.

    x_ref : (NB*Cin, H*W)   inputs; (image, channel) pairs on sublanes, pixels on lanes
    wd_ref: (NB*Cin, 9)     depthwise taps (tiled per image), tap t = kh*3 + kw
    bd_ref: (NB*Cin, 1)     depthwise bias (tiled per image)
    wp_ref: (Cout, Cin)     pointwise weights
    bp_ref: (Cout, 1)       pointwise bias
    o_ref : (NB, Cout, H*W) outputs (lane-dense, unmasked stores)
    """
    R, HW = x_ref.shape                    # R = NB * Cin
    NB, Cout, _ = o_ref.shape

    # ---- hoisted loads: inputs / weights / biases (once per grid step) ----
    x = x_ref[...].astype(jnp.float32)             # (R, HW)
    wd_f = wd_ref[...].astype(jnp.float32)         # (R, 9)
    bd_f = bd_ref[...].astype(jnp.float32)         # (R, 1)
    wp_f = wp_ref[...].astype(jnp.float32)         # (Cout, Cin)
    bp_f = bp_ref[...].astype(jnp.float32)         # (Cout, 1)

    # ---- boundary masks on the flat H*W lane axis (cheap: 2 bit-ops + 4 cmp) ----
    idx = lax.broadcasted_iota(jnp.int32, (1, HW), 1)
    if (W & (W - 1)) == 0:
        w_idx = jnp.bitwise_and(idx, W - 1)        # idx mod W (W power of two)
    else:
        # Fallback without vector integer div/mod: h[i] = #{r in [1,H) : i >= r*W}.
        h_idx = jnp.zeros((1, HW), jnp.int32)
        for r in range(1, H):
            h_idx = h_idx + (idx >= r * W).astype(jnp.int32)
        w_idx = idx - h_idx * W

    row_ok = {-1: idx >= W, 0: None, 1: idx < (H - 1) * W}
    col_ok = {-1: w_idx >= 1, 0: None, 1: w_idx <= W - 2}

    # ---- depthwise 3x3: 9 lane rotations (XLU) + VPU FMAs, f32 acc ----
    # Batch is folded on sublanes, so this loop runs exactly once per grid step
    # over full 8-sublane vregs.
    acc = jnp.zeros((R, HW), jnp.float32)
    for kh in range(3):
        for kw in range(3):
            dh, dw = kh - 1, kw - 1
            t = kh * 3 + kw
            shift = (-(dh * W + dw)) % HW          # roll s.t. y[i] = x[i + off]
            shifted = x if shift == 0 else pltpu.roll(x, shift, axis=1)
            rm, cm = row_ok[dh], col_ok[dw]
            if rm is None and cm is None:
                mask = None
            elif rm is None:
                mask = cm
            elif cm is None:
                mask = rm
            else:
                mask = jnp.logical_and(rm, cm)
            if mask is not None:
                shifted = jnp.where(mask, shifted, 0.0)
            acc = acc + shifted * wd_f[:, t:t + 1]  # per-(image,channel) tap weight
    acc = acc + bd_f

    # ---- pointwise 1x1: tiny contraction -> VPU broadcast FMAs ----
    if Cin <= 32:
        # Hoisted out of the per-image loop (JAX does not CSE broadcast_in_dim).
        wp_cols = [wp_f[:, c:c + 1] for c in range(Cin)]        # (Cout, 1) each
        bp_init = jnp.broadcast_to(bp_f, (Cout, HW))            # (Cout, HW)
        for b in range(NB):
            out = bp_init
            for c in range(Cin):
                out = out + wp_cols[c] * acc[b * Cin + c:b * Cin + c + 1, :]
            o_ref[b] = out.astype(o_ref.dtype)
    else:
        # Large channel counts: use the MXU per image.
        for b in range(NB):
            out = jnp.dot(wp_f, acc[b * Cin:(b + 1) * Cin, :],
                          preferred_element_type=jnp.float32) + bp_f
            o_ref[b] = out.astype(o_ref.dtype)


def _parallel_tensorcores():
    """Best-effort TensorCore count per chip (v7x: 2, v5e/v6e: 1)."""
    try:
        kind = jax.devices()[0].device_kind.lower()
    except Exception:
        return 1
    single_tc = ("v5 lite", "v5e", "v5litepod", "v6 lite", "v6e")
    if any(s in kind for s in single_tc):
        return 1
    return 2


def _choose_batch_block(N, Cin, Cout, HW, itemsize, num_parallel):
    """Pick images-per-grid-step: VMEM-budgeted, sublane-aligned, TC-aware."""
    per_image = (Cin + Cout) * HW * itemsize            # in+out bytes per image
    budget = 8 * 1024 * 1024                            # double-buffered block budget

    def fits(bb):
        return 2 * bb * per_image <= budget

    # Valid blocks: divide N evenly and keep the folded (bb*Cin, HW) tile
    # 8-sublane aligned (or cover the full folded array when bb == N).
    cands = [bb for bb in range(1, N + 1)
             if N % bb == 0 and ((bb * Cin) % 8 == 0 or bb == N)]

    want_steps = max(1, min(num_parallel, N))           # 1 step on v5e/v6e, 2 on v7x
    target = max(1, N // want_steps)

    fitting = [bb for bb in cands if fits(bb)] or [min(cands)]
    below = [bb for bb in fitting if bb <= target]
    return max(below) if below else min(fitting)


def depthwise_separable_conv(x_nchw, wd, bd, wp, bp, *, batch_block=None):
    """x_nchw: (N, Cin, H, W); wd: (Cin,3,3); bd: (Cin,); wp: (Cout,Cin); bp: (Cout,).

    Returns (N, Cout, H, W), matching the PyTorch module's forward.
    """
    N, Cin, H, W = x_nchw.shape
    Cout = wp.shape[0]
    HW = H * W
    itemsize = x_nchw.dtype.itemsize

    if batch_block is None:
        batch_block = _choose_batch_block(N, Cin, Cout, HW, itemsize,
                                          _parallel_tensorcores())
    else:
        batch_block = max(1, min(N, batch_block))
        # keep divisibility + sublane alignment of the folded tile
        while N % batch_block or ((batch_block * Cin) % 8 and batch_block != N):
            batch_block += 1
    grid_steps = N // batch_block

    # Metadata-only reshapes (no transpose, no pad HLOs around the kernel):
    # batch folded onto the sublane axis of the input.
    x_flat = x_nchw.reshape(N * Cin, HW)
    wp_k = wp.reshape(Cout, Cin)
    bp_k = bp.reshape(Cout, 1)
    # Tiny depthwise weight/bias blocks tiled once per image-in-block.
    wd_k = jnp.tile(wd.reshape(Cin, 9), (batch_block, 1))     # (NB*Cin, 9)
    bd_k = jnp.tile(bd.reshape(Cin, 1), (batch_block, 1))     # (NB*Cin, 1)

    # VMEM limit derived from actual block bytes (keeps larger shapes legal on
    # v7x's 64 MiB VMEM while never exceeding any generation's safe default).
    in_block = batch_block * Cin * HW * itemsize
    out_block = batch_block * Cout * HW * itemsize
    vmem_limit = int(min(32 << 20, max(16 << 20, 8 * (in_block + out_block))))

    kernel = functools.partial(_dsconv_kernel, H=H, W=W, Cin=Cin)

    out_flat = pl.pallas_call(
        kernel,
        out_shape=jax.ShapeDtypeStruct((N, Cout, HW), x_nchw.dtype),
        grid_spec=pltpu.PrefetchScalarGridSpec(
            num_scalar_prefetch=0,
            grid=(grid_steps,),
            in_specs=[
                pl.BlockSpec((batch_block * Cin, HW), lambda n: (n, 0)),
                pl.BlockSpec((batch_block * Cin, 9), lambda n: (0, 0)),
                pl.BlockSpec((batch_block * Cin, 1), lambda n: (0, 0)),
                pl.BlockSpec((Cout, Cin), lambda n: (0, 0)),
                pl.BlockSpec((Cout, 1), lambda n: (0, 0)),
            ],
            out_specs=pl.BlockSpec((batch_block, Cout, HW), lambda n: (n, 0, 0)),
        ),
        compiler_params=pltpu.CompilerParams(
            dimension_semantics=("parallel",),
            vmem_limit_bytes=vmem_limit),
    )(x_flat, wd_k, bd_k, wp_k, bp_k)

    return out_flat.reshape(N, Cout, H, W)


def _reference(x_nchw, wd, bd, wp, bp):
    """Pure-JAX reference using lax.conv (mirrors the PyTorch module)."""
    Cin = x_nchw.shape[1]
    Cout = wp.shape[0]
    dw = lax.conv_general_dilated(
        x_nchw, wd.reshape(Cin, 1, 3, 3), window_strides=(1, 1),
        padding=((1, 1), (1, 1)), feature_group_count=Cin,
        dimension_numbers=("NCHW", "OIHW", "NCHW"))
    dw = dw + bd.reshape(1, Cin, 1, 1)
    pw = lax.conv_general_dilated(
        dw, wp.reshape(Cout, Cin, 1, 1), window_strides=(1, 1),
        padding=((0, 0), (0, 0)),
        dimension_numbers=("NCHW", "OIHW", "NCHW"))
    return pw + bp.reshape(1, Cout, 1, 1)


if __name__ == "__main__":
    N, Cin, Cout, H, W = 2, 4, 8, 16, 16

    key = jax.random.PRNGKey(0)
    kx, kwd, kbd, kwp, kbp = jax.random.split(key, 5)

    x = jax.random.normal(kx, (N, Cin, H, W), dtype=jnp.float32)
    wd = jax.random.normal(kwd, (Cin, 3, 3), dtype=jnp.float32) * 0.1   # depthwise (nin,1,3,3) squeezed
    bd = jax.random.normal(kbd, (Cin,), dtype=jnp.float32) * 0.1
    wp = jax.random.normal(kwp, (Cout, Cin), dtype=jnp.float32) * 0.1   # pointwise (nout,nin,1,1) squeezed
    bp = jax.random.normal(kbp, (Cout,), dtype=jnp.float32) * 0.1

    out = depthwise_separable_conv(x, wd, bd, wp, bp)
    out = jax.block_until_ready(out)

    ref = _reference(x, wd, bd, wp, bp)
    assert out.shape == (N, Cout, H, W)
    assert jnp.allclose(out, ref, atol=1e-4, rtol=1e-4), "mismatch vs reference"

    print("KERNEL_OK")
</pallas_src>

<mosaic_0001>
module attributes {stable_mosaic.version = 11 : i64} {
  func.func @_dsconv_kernel(%arg0: i32, %arg1: memref<8x256xf32, #tpu.memory_space<vmem>>, %arg2: memref<8x9xf32, #tpu.memory_space<vmem>>, %arg3: memref<8x1xf32, #tpu.memory_space<vmem>>, %arg4: memref<8x4xf32, #tpu.memory_space<vmem>>, %arg5: memref<8x1xf32, #tpu.memory_space<vmem>>, %arg6: memref<2x8x256xf32, #tpu.memory_space<vmem>>) attributes {dimension_semantics = [#tpu.dimension_semantics<parallel>], iteration_bounds = array<i64: 1>, scalar_prefetch = 0 : i64, scratch_operands = 0 : i64, tpu.core_type = #tpu.core_type<tc>, window_params = [{transform_indices = @transform_0, window_bounds = array<i64: 8, 256>}, {pipeline_mode = #tpu.pipeline_mode<synchronous>, transform_indices = @transform_1, window_bounds = array<i64: 8, 9>}, {pipeline_mode = #tpu.pipeline_mode<synchronous>, transform_indices = @transform_2, window_bounds = array<i64: 8, 1>}, {pipeline_mode = #tpu.pipeline_mode<synchronous>, transform_indices = @transform_3, window_bounds = array<i64: 8, 4>}, {pipeline_mode = #tpu.pipeline_mode<synchronous>, transform_indices = @transform_4, window_bounds = array<i64: 8, 1>}, {transform_indices = @transform_5, window_bounds = array<i64: 2, 8, 256>}]} {
    %c0 = arith.constant 0 : index
    %c0_0 = arith.constant 0 : index
    %0 = vector.load %arg1[%c0, %c0_0] : memref<8x256xf32, #tpu.memory_space<vmem>>, vector<8x256xf32>
    %c0_1 = arith.constant 0 : index
    %c0_2 = arith.constant 0 : index
    %1 = vector.load %arg2[%c0_1, %c0_2] : memref<8x9xf32, #tpu.memory_space<vmem>>, vector<8x9xf32>
    %c0_3 = arith.constant 0 : index
    %c0_4 = arith.constant 0 : index
    %2 = vector.load %arg3[%c0_3, %c0_4] : memref<8x1xf32, #tpu.memory_space<vmem>>, vector<8x1xf32>
    %c0_5 = arith.constant 0 : index
    %c0_6 = arith.constant 0 : index
    %3 = vector.load %arg4[%c0_5, %c0_6] : memref<8x4xf32, #tpu.memory_space<vmem>>, vector<8x4xf32>
    %c0_7 = arith.constant 0 : index
    %c0_8 = arith.constant 0 : index
    %4 = vector.load %arg5[%c0_7, %c0_8] : memref<8x1xf32, #tpu.memory_space<vmem>>, vector<8x1xf32>
    %5 = tpu.iota {dimensions = array<i32: 1>} : vector<1x256xi32>
    %c15_i32 = arith.constant 15 : i32
    %6 = vector.broadcast %c15_i32 : i32 to vector<1x256xi32>
    %7 = arith.andi %5, %6 : vector<1x256xi32>
    %c16_i32 = arith.constant 16 : i32
    %8 = vector.broadcast %c16_i32 : i32 to vector<1x256xi32>
    %9 = arith.cmpi sge, %5, %8 : vector<1x256xi32>
    %c240_i32 = arith.constant 240 : i32
    %10 = vector.broadcast %c240_i32 : i32 to vector<1x256xi32>
    %11 = arith.cmpi slt, %5, %10 : vector<1x256xi32>
    %c1_i32 = arith.constant 1 : i32
    %12 = vector.broadcast %c1_i32 : i32 to vector<1x256xi32>
    %13 = arith.cmpi sge, %7, %12 : vector<1x256xi32>
    %c14_i32 = arith.constant 14 : i32
    %14 = vector.broadcast %c14_i32 : i32 to vector<1x256xi32>
    %15 = arith.cmpi sle, %7, %14 : vector<1x256xi32>
    %cst = arith.constant 0.000000e+00 : f32
    %16 = vector.broadcast %cst : f32 to vector<8x256xf32>
    %c17_i32 = arith.constant 17 : i32
    %17 = tpu.dynamic_rotate %0 by %c17_i32 dim 1 : vector<8x256xf32>, i32 -> vector<8x256xf32>
    %18 = arith.andi %9, %13 : vector<1x256xi1>
    %cst_9 = arith.constant 0.000000e+00 : f32
    %19 = vector.shape_cast %18 : vector<1x256xi1> to vector<1x256xi1>
    %20 = vector.broadcast %19 : vector<1x256xi1> to vector<8x256xi1>
    %21 = vector.broadcast %cst_9 : f32 to vector<8x256xf32>
    %22 = arith.select %20, %17, %21 : vector<8x256xi1>, vector<8x256xf32>
    %23 = vector.extract_strided_slice %1 {offsets = [0, 0], sizes = [8, 1], strides = [1, 1]} : vector<8x9xf32> to vector<8x1xf32>
    %24 = vector.broadcast %23 : vector<8x1xf32> to vector<8x256xf32>
    %25 = arith.mulf %22, %24 : vector<8x256xf32>
    %26 = arith.addf %16, %25 : vector<8x256xf32>
    %c16_i32_10 = arith.constant 16 : i32
    %27 = tpu.dynamic_rotate %0 by %c16_i32_10 dim 1 : vector<8x256xf32>, i32 -> vector<8x256xf32>
    %cst_11 = arith.constant 0.000000e+00 : f32
    %28 = vector.shape_cast %9 : vector<1x256xi1> to vector<1x256xi1>
    %29 = vector.broadcast %28 : vector<1x256xi1> to vector<8x256xi1>
    %30 = vector.broadcast %cst_11 : f32 to vector<8x256xf32>
    %31 = arith.select %29, %27, %30 : vector<8x256xi1>, vector<8x256xf32>
    %32 = vector.extract_strided_slice %1 {offsets = [0, 1], sizes = [8, 1], strides = [1, 1]} : vector<8x9xf32> to vector<8x1xf32>
    %33 = vector.broadcast %32 : vector<8x1xf32> to vector<8x256xf32>
    %34 = arith.mulf %31, %33 : vector<8x256xf32>
    %35 = arith.addf %26, %34 : vector<8x256xf32>
    %c15_i32_12 = arith.constant 15 : i32
    %36 = tpu.dynamic_rotate %0 by %c15_i32_12 dim 1 : vector<8x256xf32>, i32 -> vector<8x256xf32>
    %37 = arith.andi %9, %15 : vector<1x256xi1>
    %cst_13 = arith.constant 0.000000e+00 : f32
    %38 = vector.shape_cast %37 : vector<1x256xi1> to vector<1x256xi1>
    %39 = vector.broadcast %38 : vector<1x256xi1> to vector<8x256xi1>
    %40 = vector.broadcast %cst_13 : f32 to vector<8x256xf32>
    %41 = arith.select %39, %36, %40 : vector<8x256xi1>, vector<8x256xf32>
    %42 = vector.extract_strided_slice %1 {offsets = [0, 2], sizes = [8, 1], strides = [1, 1]} : vector<8x9xf32> to vector<8x1xf32>
    %43 = vector.broadcast %42 : vector<8x1xf32> to vector<8x256xf32>
    %44 = arith.mulf %41, %43 : vector<8x256xf32>
    %45 = arith.addf %35, %44 : vector<8x256xf32>
    %c1_i32_14 = arith.constant 1 : i32
    %46 = tpu.dynamic_rotate %0 by %c1_i32_14 dim 1 : vector<8x256xf32>, i32 -> vector<8x256xf32>
    %cst_15 = arith.constant 0.000000e+00 : f32
    %47 = vector.shape_cast %13 : vector<1x256xi1> to vector<1x256xi1>
    %48 = vector.broadcast %47 : vector<1x256xi1> to vector<8x256xi1>
    %49 = vector.broadcast %cst_15 : f32 to vector<8x256xf32>
    %50 = arith.select %48, %46, %49 : vector<8x256xi1>, vector<8x256xf32>
    %51 = vector.extract_strided_slice %1 {offsets = [0, 3], sizes = [8, 1], strides = [1, 1]} : vector<8x9xf32> to vector<8x1xf32>
    %52 = vector.broadcast %51 : vector<8x1xf32> to vector<8x256xf32>
    %53 = arith.mulf %50, %52 : vector<8x256xf32>
    %54 = arith.addf %45, %53 : vector<8x256xf32>
    %55 = vector.extract_strided_slice %1 {offsets = [0, 4], sizes = [8, 1], strides = [1, 1]} : vector<8x9xf32> to vector<8x1xf32>
    %56 = vector.broadcast %55 : vector<8x1xf32> to vector<8x256xf32>
    %57 = arith.mulf %0, %56 : vector<8x256xf32>
    %58 = arith.addf %54, %57 : vector<8x256xf32>
    %c255_i32 = arith.constant 255 : i32
    %59 = tpu.dynamic_rotate %0 by %c255_i32 dim 1 : vector<8x256xf32>, i32 -> vector<8x256xf32>
    %cst_16 = arith.constant 0.000000e+00 : f32
    %60 = vector.shape_cast %15 : vector<1x256xi1> to vector<1x256xi1>
    %61 = vector.broadcast %60 : vector<1x256xi1> to vector<8x256xi1>
    %62 = vector.broadcast %cst_16 : f32 to vector<8x256xf32>
    %63 = arith.select %61, %59, %62 : vector<8x256xi1>, vector<8x256xf32>
    %64 = vector.extract_strided_slice %1 {offsets = [0, 5], sizes = [8, 1], strides = [1, 1]} : vector<8x9xf32> to vector<8x1xf32>
    %65 = vector.broadcast %64 : vector<8x1xf32> to vector<8x256xf32>
    %66 = arith.mulf %63, %65 : vector<8x256xf32>
    %67 = arith.addf %58, %66 : vector<8x256xf32>
    %c241_i32 = arith.constant 241 : i32
    %68 = tpu.dynamic_rotate %0 by %c241_i32 dim 1 : vector<8x256xf32>, i32 -> vector<8x256xf32>
    %69 = arith.andi %11, %13 : vector<1x256xi1>
    %cst_17 = arith.constant 0.000000e+00 : f32
    %70 = vector.shape_cast %69 : vector<1x256xi1> to vector<1x256xi1>
    %71 = vector.broadcast %70 : vector<1x256xi1> to vector<8x256xi1>
    %72 = vector.broadcast %cst_17 : f32 to vector<8x256xf32>
    %73 = arith.select %71, %68, %72 : vector<8x256xi1>, vector<8x256xf32>
    %74 = vector.extract_strided_slice %1 {offsets = [0, 6], sizes = [8, 1], strides = [1, 1]} : vector<8x9xf32> to vector<8x1xf32>
    %75 = vector.broadcast %74 : vector<8x1xf32> to vector<8x256xf32>
    %76 = arith.mulf %73, %75 : vector<8x256xf32>
    %77 = arith.addf %67, %76 : vector<8x256xf32>
    %c240_i32_18 = arith.constant 240 : i32
    %78 = tpu.dynamic_rotate %0 by %c240_i32_18 dim 1 : vector<8x256xf32>, i32 -> vector<8x256xf32>
    %cst_19 = arith.constant 0.000000e+00 : f32
    %79 = vector.shape_cast %11 : vector<1x256xi1> to vector<1x256xi1>
    %80 = vector.broadcast %79 : vector<1x256xi1> to vector<8x256xi1>
    %81 = vector.broadcast %cst_19 : f32 to vector<8x256xf32>
    %82 = arith.select %80, %78, %81 : vector<8x256xi1>, vector<8x256xf32>
    %83 = vector.extract_strided_slice %1 {offsets = [0, 7], sizes = [8, 1], strides = [1, 1]} : vector<8x9xf32> to vector<8x1xf32>
    %84 = vector.broadcast %83 : vector<8x1xf32> to vector<8x256xf32>
    %85 = arith.mulf %82, %84 : vector<8x256xf32>
    %86 = arith.addf %77, %85 : vector<8x256xf32>
    %c239_i32 = arith.constant 239 : i32
    %87 = tpu.dynamic_rotate %0 by %c239_i32 dim 1 : vector<8x256xf32>, i32 -> vector<8x256xf32>
    %88 = arith.andi %11, %15 : vector<1x256xi1>
    %cst_20 = arith.constant 0.000000e+00 : f32
    %89 = vector.shape_cast %88 : vector<1x256xi1> to vector<1x256xi1>
    %90 = vector.broadcast %89 : vector<1x256xi1> to vector<8x256xi1>
    %91 = vector.broadcast %cst_20 : f32 to vector<8x256xf32>
    %92 = arith.select %90, %87, %91 : vector<8x256xi1>, vector<8x256xf32>
    %93 = vector.extract_strided_slice %1 {offsets = [0, 8], sizes = [8, 1], strides = [1, 1]} : vector<8x9xf32> to vector<8x1xf32>
    %94 = vector.broadcast %93 : vector<8x1xf32> to vector<8x256xf32>
    %95 = arith.mulf %92, %94 : vector<8x256xf32>
    %96 = arith.addf %86, %95 : vector<8x256xf32>
    %97 = vector.broadcast %2 : vector<8x1xf32> to vector<8x256xf32>
    %98 = arith.addf %96, %97 : vector<8x256xf32>
    %99 = vector.extract_strided_slice %3 {offsets = [0, 0], sizes = [8, 1], strides = [1, 1]} : vector<8x4xf32> to vector<8x1xf32>
    %100 = vector.extract_strided_slice %3 {offsets = [0, 1], sizes = [8, 1], strides = [1, 1]} : vector<8x4xf32> to vector<8x1xf32>
    %101 = vector.extract_strided_slice %3 {offsets = [0, 2], sizes = [8, 1], strides = [1, 1]} : vector<8x4xf32> to vector<8x1xf32>
    %102 = vector.extract_strided_slice %3 {offsets = [0, 3], sizes = [8, 1], strides = [1, 1]} : vector<8x4xf32> to vector<8x1xf32>
    %103 = vector.shape_cast %4 : vector<8x1xf32> to vector<8x1xf32>
    %104 = vector.broadcast %103 : vector<8x1xf32> to vector<8x256xf32>
    %105 = vector.extract_strided_slice %98 {offsets = [0, 0], sizes = [1, 256], strides = [1, 1]} : vector<8x256xf32> to vector<1x256xf32>
    %106 = vector.broadcast %99 : vector<8x1xf32> to vector<8x256xf32>
    %107 = vector.broadcast %105 : vector<1x256xf32> to vector<8x256xf32>
    %108 = arith.mulf %106, %107 : vector<8x256xf32>
    %109 = arith.addf %104, %108 : vector<8x256xf32>
    %110 = vector.extract_strided_slice %98 {offsets = [1, 0], sizes = [1, 256], strides = [1, 1]} : vector<8x256xf32> to vector<1x256xf32>
    %111 = vector.broadcast %100 : vector<8x1xf32> to vector<8x256xf32>
    %112 = vector.broadcast %110 : vector<1x256xf32> to vector<8x256xf32>
    %113 = arith.mulf %111, %112 : vector<8x256xf32>
    %114 = arith.addf %109, %113 : vector<8x256xf32>
    %115 = vector.extract_strided_slice %98 {offsets = [2, 0], sizes = [1, 256], strides = [1, 1]} : vector<8x256xf32> to vector<1x256xf32>
    %116 = vector.broadcast %101 : vector<8x1xf32> to vector<8x256xf32>
    %117 = vector.broadcast %115 : vector<1x256xf32> to vector<8x256xf32>
    %118 = arith.mulf %116, %117 : vector<8x256xf32>
    %119 = arith.addf %114, %118 : vector<8x256xf32>
    %120 = vector.extract_strided_slice %98 {offsets = [3, 0], sizes = [1, 256], strides = [1, 1]} : vector<8x256xf32> to vector<1x256xf32>
    %121 = vector.broadcast %102 : vector<8x1xf32> to vector<8x256xf32>
    %122 = vector.broadcast %120 : vector<1x256xf32> to vector<8x256xf32>
    %123 = arith.mulf %121, %122 : vector<8x256xf32>
    %124 = arith.addf %119, %123 : vector<8x256xf32>
    %c0_21 = arith.constant 0 : index
    %c0_22 = arith.constant 0 : index
    %c0_23 = arith.constant 0 : index
    %125 = vector.load %arg6[%c0_21, %c0_22, %c0_23] : memref<2x8x256xf32, #tpu.memory_space<vmem>>, vector<1x8x256xf32>
    %126 = vector.shape_cast %125 : vector<1x8x256xf32> to vector<8x256xf32>
    %127 = vector.shape_cast %124 : vector<8x256xf32> to vector<1x8x256xf32>
    tpu.vector_store %arg6[%c0_21, %c0_22, %c0_23], %127 {strides = array<i32>} : memref<2x8x256xf32, #tpu.memory_space<vmem>>, vector<1x8x256xf32>,
    %128 = vector.extract_strided_slice %98 {offsets = [4, 0], sizes = [1, 256], strides = [1, 1]} : vector<8x256xf32> to vector<1x256xf32>
    %129 = vector.broadcast %99 : vector<8x1xf32> to vector<8x256xf32>
    %130 = vector.broadcast %128 : vector<1x256xf32> to vector<8x256xf32>
    %131 = arith.mulf %129, %130 : vector<8x256xf32>
    %132 = arith.addf %104, %131 : vector<8x256xf32>
    %133 = vector.extract_strided_slice %98 {offsets = [5, 0], sizes = [1, 256], strides = [1, 1]} : vector<8x256xf32> to vector<1x256xf32>
    %134 = vector.broadcast %100 : vector<8x1xf32> to vector<8x256xf32>
    %135 = vector.broadcast %133 : vector<1x256xf32> to vector<8x256xf32>
    %136 = arith.mulf %134, %135 : vector<8x256xf32>
    %137 = arith.addf %132, %136 : vector<8x256xf32>
    %138 = vector.extract_strided_slice %98 {offsets = [6, 0], sizes = [1, 256], strides = [1, 1]} : vector<8x256xf32> to vector<1x256xf32>
    %139 = vector.broadcast %101 : vector<8x1xf32> to vector<8x256xf32>
    %140 = vector.broadcast %138 : vector<1x256xf32> to vector<8x256xf32>
    %141 = arith.mulf %139, %140 : vector<8x256xf32>
    %142 = arith.addf %137, %141 : vector<8x256xf32>
    %143 = vector.extract_strided_slice %98 {offsets = [7, 0], sizes = [1, 256], strides = [1, 1]} : vector<8x256xf32> to vector<1x256xf32>
    %144 = vector.broadcast %102 : vector<8x1xf32> to vector<8x256xf32>
    %145 = vector.broadcast %143 : vector<1x256xf32> to vector<8x256xf32>
    %146 = arith.mulf %144, %145 : vector<8x256xf32>
    %147 = arith.addf %142, %146 : vector<8x256xf32>
    %c1 = arith.constant 1 : index
    %c0_24 = arith.constant 0 : index
    %c0_25 = arith.constant 0 : index
    %148 = vector.load %arg6[%c1, %c0_24, %c0_25] : memref<2x8x256xf32, #tpu.memory_space<vmem>>, vector<1x8x256xf32>
    %149 = vector.shape_cast %148 : vector<1x8x256xf32> to vector<8x256xf32>
    %150 = vector.shape_cast %147 : vector<8x256xf32> to vector<1x8x256xf32>
    tpu.vector_store %arg6[%c1, %c0_24, %c0_25], %150 {strides = array<i32>} : memref<2x8x256xf32, #tpu.memory_space<vmem>>, vector<1x8x256xf32>,
    return
  }
  func.func @transform_0(%arg0: i32) -> (i32, i32) {
    %c0_i32 = arith.constant 0 : i32
    %c0_i32_0 = arith.constant 0 : i32
    return %arg0, %c0_i32 : i32, i32
  }
  func.func @transform_1(%arg0: i32) -> (i32, i32) {
    %c0_i32 = arith.constant 0 : i32
    %c0_i32_0 = arith.constant 0 : i32
    %c0_i32_1 = arith.constant 0 : i32
    return %c0_i32, %c0_i32_0 : i32, i32
  }
  func.func @transform_2(%arg0: i32) -> (i32, i32) {
    %c0_i32 = arith.constant 0 : i32
    %c0_i32_0 = arith.constant 0 : i32
    %c0_i32_1 = arith.constant 0 : i32
    return %c0_i32, %c0_i32_0 : i32, i32
  }
  func.func @transform_3(%arg0: i32) -> (i32, i32) {
    %c0_i32 = arith.constant 0 : i32
    %c0_i32_0 = arith.constant 0 : i32
    %c0_i32_1 = arith.constant 0 : i32
    return %c0_i32, %c0_i32_0 : i32, i32
  }
  func.func @transform_4(%arg0: i32) -> (i32, i32) {
    %c0_i32 = arith.constant 0 : i32
    %c0_i32_0 = arith.constant 0 : i32
    %c0_i32_1 = arith.constant 0 : i32
    return %c0_i32, %c0_i32_0 : i32, i32
  }
  func.func @transform_5(%arg0: i32) -> (i32, i32, i32) {
    %c0_i32 = arith.constant 0 : i32
    %c0_i32_0 = arith.constant 0 : i32
    %c0_i32_1 = arith.constant 0 : i32
    return %arg0, %c0_i32, %c0_i32_0 : i32, i32, i32
  }
}

</mosaic_0001>

<llo_original>
// kernel: tpu_custom_call.1
$region0: #{tpu_custom_call.1}
  #allocation0 [shape = 'u32[]', space=smem, size = 0x4, offset = 0x4, fixed_abs, tag = 'smem constant byte address 0x4 - core index']
  #allocation1 [shape = 'u32[144,128]{1,0:T(1,128)}', space=vmem, size = 0x12000, scoped, tag = 'internal scratch']
  %s0 = inlined_call_operand.vmem [shape: f32[8,256], index: 0, kind: input, shape index: {}]
  %s1 = inlined_call_operand.vmem [shape: f32[8,9], index: 1, kind: input, shape index: {}]
  %s2 = inlined_call_operand.vmem [shape: f32[8,1], index: 2, kind: input, shape index: {}]
  %s3 = inlined_call_operand.vmem [shape: f32[8,4], index: 3, kind: input, shape index: {}]
  %s4 = inlined_call_operand.vmem [shape: f32[8,1], index: 4, kind: input, shape index: {}]
  %s5 = inlined_call_operand.hbm [shape: f32[2,8,256], index: 5, kind: output, shape index: {}]
  %s6 = sld [smem:[#allocation0]]
  $region30: #{tpu_custom_call.1} parent=0
    _
  %s8 = ssub.s32 1, %s6
  %s9 = scalar_select 0, %s8, %s6
  $region1: #{tpu_custom_call.1} parent=0
    #allocation2 [shape = 'u8[16384]{0}', space=vmem, size = 0x4000, scoped, tag = 'output window, operand 0, single buffered']
    #allocation3 [shape = 's32[1]{0}', space=sflag, size = 0x4, scoped, tag = 'scoped memory for tpu_custom_call.1']
    %10 = vsyncpa [#allocation3], 0
    // Predicated region
    $region2: #{tpu_custom_call.1} parent=1 // pred_check
      _
    $region3: #{tpu_custom_call.1} parent=1 // pred_check_branch
      %12 = sbr.rel (0) target = $region5
    $region4: #{tpu_custom_call.1} parent=1 // pred_region
      _
    $region5: #{tpu_custom_call.1} parent=1 // pred_fallthru
      _
    // Predicated region
    $region6: #{tpu_custom_call.1} parent=1 // pred_check
      _
    $region7: #{tpu_custom_call.1} parent=1 // pred_check_branch
      %14 = sbr.rel (0) target = $region9
    $region8: #{tpu_custom_call.1} parent=1 // pred_region
      _
    $region9: #{tpu_custom_call.1} parent=1 // pred_fallthru
      _
    // Predicated region
    $region10: #{tpu_custom_call.1} parent=1 // pred_check
      _
    $region11: #{tpu_custom_call.1} parent=1 // pred_check_branch
      %16 = sbr.rel (0) target = $region13
    $region12: #{tpu_custom_call.1} parent=1 // pred_region
      _
    $region13: #{tpu_custom_call.1} parent=1 // pred_fallthru
      _
    // Predicated region
    $region14: #{tpu_custom_call.1} parent=1 // pred_check
      _
    $region15: #{tpu_custom_call.1} parent=1 // pred_check_branch
      %18 = sbr.rel (0) target = $region17
    $region16: #{tpu_custom_call.1} parent=1 // pred_region
      _
    $region17: #{tpu_custom_call.1} parent=1 // pred_fallthru
      _
    // Predicated region
    $region18: #{tpu_custom_call.1} parent=1 // pred_check
      _
    $region19: #{tpu_custom_call.1} parent=1 // pred_check_branch
      %20 = sbr.rel (0) target = $region21
    $region20: #{tpu_custom_call.1} parent=1 // pred_region
      _
    $region21: #{tpu_custom_call.1} parent=1 // pred_fallthru
      _
    %v21 = vld [vmem:[%s0] sm:$0xff]
    %v22 = vld [vmem:[%s0 + $0x8] sm:$0xff]
    %v23 = vld [vmem:[%s1] sm:$0xff]
    %v24 = vld [vmem:[%s2] sm:$0xff]
    %v25 = vld [vmem:[%s3] sm:$0xff]
    %v26 = vld [vmem:[%s4] sm:$0xff]
    %v27 = vlaneseq
    %v28 = vand.u32 %v27, 127
    %v29 = vadd.s32 %v28, 128
    %v30 = vand.u32 %v28, 15
    %v31 = vand.u32 %v29, 15
    %vm32 = vcmp.ge.s32.totalorder %v28, 16
    %vm33 = vcmp.ge.s32.totalorder %v29, 16
    %vm34 = vcmp.lt.s32.totalorder %v28, 240
    %vm35 = vcmp.lt.s32.totalorder %v29, 240
    %vm36 = vcmp.ge.s32.totalorder %v30, 1
    %vm37 = vcmp.ge.s32.totalorder %v31, 1
    %vm38 = vcmp.le.s32.totalorder %v30, 14
    %vm39 = vcmp.le.s32.totalorder %v31, 14
    %40 = vrot.lane.b32.xlu0 %v21, 17
    %v41 = vpop.permute.xlu0 %40
    %42 = vrot.lane.b32.xlu0 %v22, 17
    %v43 = vpop.permute.xlu0 %42
    %vm44 = vcmp.lt.s32.totalorder %v28, 17
    %v45 = vsel %vm44, %v41, %v43
    %v46 = vsel %vm44, %v43, %v41
    %vm47 = vmand %vm32, %vm36
    %vm48 = vmand %vm33, %vm37
    %v49 = vsel %vm47, 1, 0
    %v50 = vsel %vm48, 1, 0
    %vm51 = vcmp.eq.s32.totalorder %v49, 1
    %vm52 = vcmp.eq.s32.totalorder %v50, 1
    %v53 = vsel %vm51, %v46, 0.0
    %v54 = vsel %vm52, %v45, 0.0
    %56 = vset.pattern.permute.xlu0 0
    %57 = vperm.xlu0 %56, %v23
    %v58 = vpop.permute.xlu0 %57
    %v60 = vmul.f32 %v53, %v58
    %v61 = vmul.f32 %v54, %v58
    %v62 = vadd.f32 %v60, 0.0
    %v63 = vadd.f32 %v61, 0.0
    %64 = vrot.lane.b32.xlu0 %v21, 16
    %v65 = vpop.permute.xlu0 %64
    %66 = vrot.lane.b32.xlu0 %v22, 16
    %v67 = vpop.permute.xlu0 %66
    %vm68 = vcmp.lt.s32.totalorder %v28, 16
    %v69 = vsel %vm68, %v65, %v67
    %v70 = vsel %vm68, %v67, %v65
    %v71 = vsel %vm32, 1, 0
    %v72 = vsel %vm33, 1, 0
    %vm73 = vcmp.eq.s32.totalorder %v71, 1
    %vm74 = vcmp.eq.s32.totalorder %v72, 1
    %v75 = vsel %vm73, %v70, 0.0
    %v76 = vsel %vm74, %v69, 0.0
    %77 = vset.pattern.permute.xlu0 1
    %78 = vperm.xlu0 %77, %v23
    %v79 = vpop.permute.xlu0 %78
    %v81 = vmul.f32 %v75, %v79
    %v82 = vmul.f32 %v76, %v79
    %v83 = vadd.f32 %v62, %v81
    %v84 = vadd.f32 %v63, %v82
    %85 = vrot.lane.b32.xlu0 %v21, 15
    %v86 = vpop.permute.xlu0 %85
    %87 = vrot.lane.b32.xlu0 %v22, 15
    %v88 = vpop.permute.xlu0 %87
    %vm89 = vcmp.lt.s32.totalorder %v28, 15
    %v90 = vsel %vm89, %v86, %v88
    %v91 = vsel %vm89, %v88, %v86
    %vm92 = vmand %vm32, %vm38
    %vm93 = vmand %vm33, %vm39
    %v94 = vsel %vm92, 1, 0
    %v95 = vsel %vm93, 1, 0
    %vm96 = vcmp.eq.s32.totalorder %v94, 1
    %vm97 = vcmp.eq.s32.totalorder %v95, 1
    %v98 = vsel %vm96, %v91, 0.0
    %v99 = vsel %vm97, %v90, 0.0
    %100 = vset.pattern.permute.xlu0 2
    %101 = vperm.xlu0 %100, %v23
    %v102 = vpop.permute.xlu0 %101
    %v104 = vmul.f32 %v98, %v102
    %v105 = vmul.f32 %v99, %v102
    %v106 = vadd.f32 %v83, %v104
    %v107 = vadd.f32 %v84, %v105
    %108 = vrot.lane.b32.xlu0 %v21, 1
    %v109 = vpop.permute.xlu0 %108
    %110 = vrot.lane.b32.xlu0 %v22, 1
    %v111 = vpop.permute.xlu0 %110
    %vm112 = vcmp.lt.s32.totalorder %v28, 1
    %v113 = vsel %vm112, %v109, %v111
    %v114 = vsel %vm112, %v111, %v109
    %v115 = vsel %vm36, 1, 0
    %v116 = vsel %vm37, 1, 0
    %vm117 = vcmp.eq.s32.totalorder %v115, 1
    %vm118 = vcmp.eq.s32.totalorder %v116, 1
    %v119 = vsel %vm117, %v114, 0.0
    %v120 = vsel %vm118, %v113, 0.0
    %121 = vset.pattern.permute.xlu0 3
    %122 = vperm.xlu0 %121, %v23
    %v123 = vpop.permute.xlu0 %122
    %v125 = vmul.f32 %v119, %v123
    %v126 = vmul.f32 %v120, %v123
    %v127 = vadd.f32 %v106, %v125
    %v128 = vadd.f32 %v107, %v126
    %129 = vset.pattern.permute.xlu0 4
    %130 = vperm.xlu0 %129, %v23
    %v131 = vpop.permute.xlu0 %130
    %v133 = vmul.f32 %v21, %v131
    %v134 = vmul.f32 %v22, %v131
    %v135 = vadd.f32 %v127, %v133
    %v136 = vadd.f32 %v128, %v134
    %137 = vrot.lane.b32.xlu0 %v21, 127
    %v138 = vpop.permute.xlu0 %137
    %139 = vrot.lane.b32.xlu0 %v22, 127
    %v140 = vpop.permute.xlu0 %139
    %vm141 = vcmp.lt.s32.totalorder %v28, 127
    %v142 = vsel %vm141, %v138, %v140
    %v143 = vsel %vm141, %v140, %v138
    %v144 = vsel %vm38, 1, 0
    %v145 = vsel %vm39, 1, 0
    %vm146 = vcmp.eq.s32.totalorder %v144, 1
    %vm147 = vcmp.eq.s32.totalorder %v145, 1
    %v148 = vsel %vm146, %v142, 0.0
    %v149 = vsel %vm147, %v143, 0.0
    %150 = vset.pattern.permute.xlu0 5
    %151 = vperm.xlu0 %150, %v23
    %v152 = vpop.permute.xlu0 %151
    %v154 = vmul.f32 %v148, %v152
    %v155 = vmul.f32 %v149, %v152
    %v156 = vadd.f32 %v135, %v154
    %v157 = vadd.f32 %v136, %v155
    %158 = vrot.lane.b32.xlu0 %v21, 113
    %v159 = vpop.permute.xlu0 %158
    %160 = vrot.lane.b32.xlu0 %v22, 113
    %v161 = vpop.permute.xlu0 %160
    %vm162 = vcmp.lt.s32.totalorder %v28, 113
    %v163 = vsel %vm162, %v159, %v161
    %v164 = vsel %vm162, %v161, %v159
    %vm165 = vmand %vm34, %vm36
    %vm166 = vmand %vm35, %vm37
    %v167 = vsel %vm165, 1, 0
    %v168 = vsel %vm166, 1, 0
    %vm169 = vcmp.eq.s32.totalorder %v167, 1
    %vm170 = vcmp.eq.s32.totalorder %v168, 1
    %v171 = vsel %vm169, %v163, 0.0
    %v172 = vsel %vm170, %v164, 0.0
    %173 = vset.pattern.permute.xlu0 6
    %174 = vperm.xlu0 %173, %v23
    %v175 = vpop.permute.xlu0 %174
    %v177 = vmul.f32 %v171, %v175
    %v178 = vmul.f32 %v172, %v175
    %v179 = vadd.f32 %v156, %v177
    %v180 = vadd.f32 %v157, %v178
    %181 = vrot.lane.b32.xlu0 %v21, 112
    %v182 = vpop.permute.xlu0 %181
    %183 = vrot.lane.b32.xlu0 %v22, 112
    %v184 = vpop.permute.xlu0 %183
    %vm185 = vcmp.lt.s32.totalorder %v28, 112
    %v186 = vsel %vm185, %v182, %v184
    %v187 = vsel %vm185, %v184, %v182
    %v188 = vsel %vm34, 1, 0
    %v189 = vsel %vm35, 1, 0
    %vm190 = vcmp.eq.s32.totalorder %v188, 1
    %vm191 = vcmp.eq.s32.totalorder %v189, 1
    %v192 = vsel %vm190, %v186, 0.0
    %v193 = vsel %vm191, %v187, 0.0
    %194 = vset.pattern.permute.xlu0 7
    %195 = vperm.xlu0 %194, %v23
    %v196 = vpop.permute.xlu0 %195
    %v198 = vmul.f32 %v192, %v196
    %v199 = vmul.f32 %v193, %v196
    %v200 = vadd.f32 %v179, %v198
    %v201 = vadd.f32 %v180, %v199
    %202 = vrot.lane.b32.xlu0 %v21, 111
    %v203 = vpop.permute.xlu0 %202
    %204 = vrot.lane.b32.xlu0 %v22, 111
    %v205 = vpop.permute.xlu0 %204
    %vm206 = vcmp.lt.s32.totalorder %v28, 111
    %v207 = vsel %vm206, %v203, %v205
    %v208 = vsel %vm206, %v205, %v203
    %vm209 = vmand %vm34, %vm38
    %vm210 = vmand %vm35, %vm39
    %v211 = vsel %vm209, 1, 0
    %v212 = vsel %vm210, 1, 0
    %vm213 = vcmp.eq.s32.totalorder %v211, 1
    %vm214 = vcmp.eq.s32.totalorder %v212, 1
    %v215 = vsel %vm213, %v207, 0.0
    %v216 = vsel %vm214, %v208, 0.0
    %217 = vset.pattern.permute.xlu0 8
    %218 = vperm.xlu0 %217, %v23
    %v219 = vpop.permute.xlu0 %218
    %v221 = vmul.f32 %v215, %v219
    %v222 = vmul.f32 %v216, %v219
    %v223 = vadd.f32 %v200, %v221
    %v224 = vadd.f32 %v201, %v222
    %226 = vset.pattern.permute.xlu0 0
    %227 = vperm.xlu0 %226, %v24
    %v228 = vpop.permute.xlu0 %227
    %v230 = vadd.f32 %v223, %v228
    %v231 = vadd.f32 %v224, %v228
    %233 = vset.pattern.permute.xlu0 0
    %234 = vperm.xlu0 %233, %v26
    %v235 = vpop.permute.xlu0 %234
    %238 = vset.pattern.permute.xlu0 0
    %239 = vperm.xlu0 %238, %v25
    %v240 = vpop.permute.xlu0 %239
    %v242 = vlaneseq
    %v243 = vshrl.u32 %v242, 7
    %v244 = vsub.s32 0, %v243
    %v245 = vrot.slane %v230, %v244
    %v246 = vlaneseq
    %v247 = vshrl.u32 %v246, 7
    %v248 = vsub.s32 0, %v247
    %v249 = vrot.slane %v231, %v248
    %v250 = vmul.f32 %v240, %v245
    %v251 = vmul.f32 %v240, %v249
    %v252 = vadd.f32 %v235, %v250
    %v253 = vadd.f32 %v235, %v251
    %254 = vset.pattern.permute.xlu0 1
    %255 = vperm.xlu0 %254, %v25
    %v256 = vpop.permute.xlu0 %255
    %v258 = vlaneseq
    %v259 = vshrl.u32 %v258, 7
    %v260 = vsub.s32 1, %v259
    %v261 = vrot.slane %v230, %v260
    %v262 = vlaneseq
    %v263 = vshrl.u32 %v262, 7
    %v264 = vsub.s32 1, %v263
    %v265 = vrot.slane %v231, %v264
    %v266 = vmul.f32 %v256, %v261
    %v267 = vmul.f32 %v256, %v265
    %v268 = vadd.f32 %v252, %v266
    %v269 = vadd.f32 %v253, %v267
    %270 = vset.pattern.permute.xlu0 2
    %271 = vperm.xlu0 %270, %v25
    %v272 = vpop.permute.xlu0 %271
    %v274 = vlaneseq
    %v275 = vshrl.u32 %v274, 7
    %v276 = vsub.s32 2, %v275
    %v277 = vrot.slane %v230, %v276
    %v278 = vlaneseq
    %v279 = vshrl.u32 %v278, 7
    %v280 = vsub.s32 2, %v279
    %v281 = vrot.slane %v231, %v280
    %v282 = vmul.f32 %v272, %v277
    %v283 = vmul.f32 %v272, %v281
    %v284 = vadd.f32 %v268, %v282
    %v285 = vadd.f32 %v269, %v283
    %286 = vset.pattern.permute.xlu0 3
    %287 = vperm.xlu0 %286, %v25
    %v288 = vpop.permute.xlu0 %287
    %v290 = vlaneseq
    %v291 = vshrl.u32 %v290, 7
    %v292 = vsub.s32 3, %v291
    %v293 = vrot.slane %v230, %v292
    %v294 = vlaneseq
    %v295 = vshrl.u32 %v294, 7
    %v296 = vsub.s32 3, %v295
    %v297 = vrot.slane %v231, %v296
    %v298 = vmul.f32 %v288, %v293
    %v299 = vmul.f32 %v288, %v297
    %v300 = vadd.f32 %v284, %v298
    %v301 = vadd.f32 %v285, %v299
    %302 = vst [vmem:[#allocation2] sm:$0xff] %v300
    %303 = vst [vmem:[#allocation2 + $0x8] sm:$0xff] %v301
    %v304 = vlaneseq
    %v305 = vshrl.u32 %v304, 7
    %v306 = vsub.s32 4, %v305
    %v307 = vrot.slane %v230, %v306
    %v308 = vlaneseq
    %v309 = vshrl.u32 %v308, 7
    %v310 = vsub.s32 4, %v309
    %v311 = vrot.slane %v231, %v310
    %v312 = vmul.f32 %v240, %v307
    %v313 = vmul.f32 %v240, %v311
    %v314 = vadd.f32 %v235, %v312
    %v315 = vadd.f32 %v235, %v313
    %v316 = vlaneseq
    %v317 = vshrl.u32 %v316, 7
    %v318 = vsub.s32 5, %v317
    %v319 = vrot.slane %v230, %v318
    %v320 = vlaneseq
    %v321 = vshrl.u32 %v320, 7
    %v322 = vsub.s32 5, %v321
    %v323 = vrot.slane %v231, %v322
    %v324 = vmul.f32 %v256, %v319
    %v325 = vmul.f32 %v256, %v323
    %v326 = vadd.f32 %v314, %v324
    %v327 = vadd.f32 %v315, %v325
    %v328 = vlaneseq
    %v329 = vshrl.u32 %v328, 7
    %v330 = vsub.s32 6, %v329
    %v331 = vrot.slane %v230, %v330
    %v332 = vlaneseq
    %v333 = vshrl.u32 %v332, 7
    %v334 = vsub.s32 6, %v333
    %v335 = vrot.slane %v231, %v334
    %v336 = vmul.f32 %v272, %v331
    %v337 = vmul.f32 %v272, %v335
    %v338 = vadd.f32 %v326, %v336
    %v339 = vadd.f32 %v327, %v337
    %v340 = vlaneseq
    %v341 = vshrl.u32 %v340, 7
    %v342 = vsub.s32 7, %v341
    %v343 = vrot.slane %v230, %v342
    %v344 = vlaneseq
    %v345 = vshrl.u32 %v344, 7
    %v346 = vsub.s32 7, %v345
    %v347 = vrot.slane %v231, %v346
    %v348 = vmul.f32 %v288, %v343
    %v349 = vmul.f32 %v288, %v347
    %v350 = vadd.f32 %v338, %v348
    %v351 = vadd.f32 %v339, %v349
    %s352 = scalar_lea.vmem [#allocation2], 16
    %353 = vst [vmem:[%s352] sm:$0xff] %v350
    %354 = vst [vmem:[%s352 + $0x8] sm:$0xff] %v351
    // Predicated region
    $region22: #{tpu_custom_call.1} parent=1 // pred_check
      _
    $region23: #{tpu_custom_call.1} parent=1 // pred_check_branch
      %356 = sbr.rel (0) target = $region25
    $region24: #{tpu_custom_call.1} parent=1 // pred_region
      %s358 = ssub.s32 512, 512
      %359 = vsyncadd [#allocation3], %s358
      %s360 = sshll.u32 [#allocation2], 4
      %s361 = int_to_ptr.vmem [resolvable:$true] %s360
      %366 = dma.vmem_to_hbm [thread:$0]  %s361, 512, %s5, [#allocation3], 256, 256, 16
    $region25: #{tpu_custom_call.1} parent=1 // pred_fallthru
      _
    // Predicated region
    $region26: #{tpu_custom_call.1} parent=1 // pred_check
      _
    $region27: #{tpu_custom_call.1} parent=1 // pred_check_branch
      %368 = sbr.rel (0) target = $region29
    $region28: #{tpu_custom_call.1} parent=1 // pred_region
      %369 = dma.done [#allocation3], 512
    $region29: #{tpu_custom_call.1} parent=1 // pred_fallthru
      _
    %370 = vsyncpa [#allocation3], 1

</llo_original>
